<compile_context>
chip_gen: v7x
topology: tpu7x:2x2x1
jax: 0.10.0
libtpu: 0.0.40
codegen_flags: <defaults>
</compile_context>

<pallas_src>
import math
from functools import partial

import jax
import jax.numpy as jnp
from jax.experimental import pallas as pl
from jax.experimental.pallas import tpu as pltpu


def channel_att_kernel_calc(num_channels, gamma=2, b=1):
    t = int(abs((math.log(num_channels, 2) + b) / gamma))
    return t if t % 2 else t + 1


def _vmem_budget_bytes():
    """Conservative per-kernel VMEM budget, derived from the actual chip."""
    try:
        cap = int(pltpu.get_tpu_info().vmem_capacity_bytes)
    except Exception:
        cap = 64 * 1024 * 1024          # conservative: v7x per-TC VMEM
    return min((cap * 3) // 4, 96 * 1024 * 1024)


# ----------------------- fused single-read kernel -----------------------
def _fused_kernel(wband_ref, wc_ref, bc_ref, x_ref, o_ref, *, inv_hw):
    # wband_ref: (C, C) banded channel-conv matrix (f32)
    # wc_ref   : (Co, C) 1x1 combine weights (f32)
    # bc_ref   : (Co, 1) combine bias (f32)
    # x_ref    : (1, C, HW) one batch plane
    # o_ref    : (1, Co, HW)
    x = x_ref[0]                                             # (C, HW)
    xf = x.astype(jnp.float32)
    pooled = (jnp.max(xf, axis=-1, keepdims=True)
              + jnp.sum(xf, axis=-1, keepdims=True) * inv_hw)  # (C, 1)
    # conv(max)+conv(avg) == conv(max+avg): conv is linear, no bias.
    att = jnp.dot(wband_ref[...], pooled,
                  preferred_element_type=jnp.float32)          # (C, 1)
    gate = jax.nn.sigmoid(att)                                 # (C, 1)
    xg = x * gate.astype(x.dtype)                              # (C, HW) gated
    out = jnp.dot(wc_ref[...].astype(x.dtype), xg,
                  preferred_element_type=jnp.float32)          # (Co, HW)
    o_ref[0] = (out + bc_ref[...]).astype(o_ref.dtype)


# -------------- streaming pass 1: per-channel spatial sum / max --------------
def _pool_kernel(x_ref, sum_ref, max_ref, *, hw, tile, mask_tail):
    # x_ref: (1, C, T) spatial tile; sum_ref / max_ref: (1, C, 1) accumulators
    t = pl.program_id(1)
    x = x_ref[0].astype(jnp.float32)                           # (C, T)
    if mask_tail:
        col = jax.lax.broadcasted_iota(jnp.int32, x.shape, 1) + t * tile
        in_bounds = col < hw
        x_sum = jnp.where(in_bounds, x, 0.0)
        x_max = jnp.where(in_bounds, x, -jnp.inf)
    else:
        x_sum = x
        x_max = x
    psum = jnp.sum(x_sum, axis=-1, keepdims=True)              # (C, 1)
    pmax = jnp.max(x_max, axis=-1, keepdims=True)              # (C, 1)

    @pl.when(t == 0)
    def _():
        sum_ref[0] = psum
        max_ref[0] = pmax

    @pl.when(t > 0)
    def _():
        sum_ref[0] = sum_ref[0] + psum
        max_ref[0] = jnp.maximum(max_ref[0], pmax)


# -------------- streaming pass 2: gate-folded 1x1 combine conv --------------
def _combine_kernel(w_ref, b_ref, x_ref, o_ref):
    # w_ref: (1, Co, C) per-batch gate-folded weights
    # b_ref: (Co, 1) bias
    # x_ref: (1, C, T) spatial tile
    # o_ref: (1, Co, T)
    out = jnp.dot(w_ref[0], x_ref[0], preferred_element_type=jnp.float32)
    o_ref[0] = (out + b_ref[...]).astype(o_ref.dtype)


def channel_attention_block(x, conv1d_w, comb_w, comb_b, *,
                            hw_tile_target=16384, force_streaming=False):
    """x: (B, C, H, W) NCHW.  Returns (B, C//2, H, W) in x.dtype."""
    B, C, H, W = x.shape
    HW = H * W
    k = conv1d_w.shape[-1]
    pad = (k - 1) // 2
    Co = comb_w.shape[0]
    dsize = x.dtype.itemsize
    out_dtype = x.dtype

    x2 = x.reshape(B, C, HW)                       # free view, no copy
    w1d = conv1d_w.reshape(k).astype(jnp.float32)
    wc = comb_w.reshape(Co, C).astype(jnp.float32)
    bc = comb_b.reshape(Co, 1).astype(jnp.float32)

    budget = _vmem_budget_bytes()

    # ----------------- fused single-read path -----------------
    # per-step VMEM: 2x plane in-bufs + 2x out-bufs + gated plane + f32 acc + weights
    fused_bytes = ((3 * C + 2 * Co) * HW * dsize
                   + Co * HW * 4
                   + (C * C + Co * C + Co) * 4
                   + (1 << 20))
    if (not force_streaming) and fused_bytes <= budget:
        # Banded matrix so att = Wband @ pooled  (== zero-padded k-tap channel conv).
        idx = jnp.arange(C)
        off = idx[None, :] - idx[:, None] + pad
        wband = jnp.where((off >= 0) & (off < k),
                          w1d[jnp.clip(off, 0, k - 1)], 0.0).astype(jnp.float32)

        ce = pl.CostEstimate(
            flops=int(2 * B * Co * C * HW + 4 * B * C * HW),
            transcendentals=int(B * C),
            bytes_accessed=int(B * (C + Co) * HW * dsize))

        out = pl.pallas_call(
            partial(_fused_kernel, inv_hw=1.0 / HW),
            out_shape=jax.ShapeDtypeStruct((B, Co, HW), out_dtype),
            grid=(B,),
            in_specs=[
                pl.BlockSpec((C, C), lambda b: (0, 0)),
                pl.BlockSpec((Co, C), lambda b: (0, 0)),
                pl.BlockSpec((Co, 1), lambda b: (0, 0)),
                pl.BlockSpec((1, C, HW), lambda b: (b, 0, 0)),
            ],
            out_specs=pl.BlockSpec((1, Co, HW), lambda b: (b, 0, 0)),
            compiler_params=pltpu.CompilerParams(
                dimension_semantics=("parallel",),
                vmem_limit_bytes=budget),
            cost_estimate=ce,
        )(wband, wc, bc, x2)
        return out.reshape(B, Co, H, W)

    # ----------------- streaming two-pass fallback -----------------
    # Tile: largest 128-multiple fitting the VMEM budget (double-buffered in+out
    # of pass 2 plus the f32 matmul result), capped at hw_tile_target.
    per_lane = 2 * (C + Co) * dsize + Co * 4
    t_cap = max(128, budget // max(per_lane, 1))
    T = min(HW, hw_tile_target, t_cap)
    if T < HW:
        T = max(128, (T // 128) * 128)
    n_t = pl.cdiv(HW, T)
    mask_tail = (HW % T) != 0

    # pass 1: streaming per-channel sum / max
    ce1 = pl.CostEstimate(flops=int(4 * B * C * HW), transcendentals=0,
                          bytes_accessed=int(B * C * HW * dsize))
    sum_p, max_p = pl.pallas_call(
        partial(_pool_kernel, hw=HW, tile=T, mask_tail=mask_tail),
        out_shape=(jax.ShapeDtypeStruct((B, C, 1), jnp.float32),
                   jax.ShapeDtypeStruct((B, C, 1), jnp.float32)),
        grid=(B, n_t),
        in_specs=[pl.BlockSpec((1, C, T), lambda b, t: (b, 0, t))],
        out_specs=(pl.BlockSpec((1, C, 1), lambda b, t: (b, 0, 0)),
                   pl.BlockSpec((1, C, 1), lambda b, t: (b, 0, 0))),
        compiler_params=pltpu.CompilerParams(
            dimension_semantics=("parallel", "arbitrary"),
            vmem_limit_bytes=budget),
        cost_estimate=ce1,
    )(x2)

    # tiny (B, C) gate math: k-tap channel conv (no bias) + sigmoid
    avg_pool = sum_p[:, :, 0] * (1.0 / HW)                     # (B, C)
    max_pool = max_p[:, :, 0]                                  # (B, C)
    pooled = max_pool + avg_pool                               # conv is linear
    pooled_pad = jnp.pad(pooled, ((0, 0), (pad, pad)))
    att = sum(w1d[j] * pooled_pad[:, j:j + C] for j in range(k))
    gate = jax.nn.sigmoid(att)                                 # (B, C)

    # fold the sigmoid gate into the 1x1 combine weights (tiny tensor)
    w_eff = (wc[None, :, :] * gate[:, None, :]).astype(x.dtype)   # (B, Co, C)

    # pass 2: lane-dense streaming channel matmul
    ce2 = pl.CostEstimate(flops=int(2 * B * Co * C * HW), transcendentals=0,
                          bytes_accessed=int(B * (C + Co) * HW * dsize))
    out = pl.pallas_call(
        _combine_kernel,
        out_shape=jax.ShapeDtypeStruct((B, Co, HW), out_dtype),
        grid=(B, n_t),
        in_specs=[
            pl.BlockSpec((1, Co, C), lambda b, t: (b, 0, 0)),
            pl.BlockSpec((Co, 1), lambda b, t: (0, 0)),
            pl.BlockSpec((1, C, T), lambda b, t: (b, 0, t)),
        ],
        out_specs=pl.BlockSpec((1, Co, T), lambda b, t: (b, 0, t)),
        compiler_params=pltpu.CompilerParams(
            dimension_semantics=("parallel", "parallel"),
            vmem_limit_bytes=budget),
        cost_estimate=ce2,
    )(w_eff, bc, x2)

    return out.reshape(B, Co, H, W)


def _reference_forward(x, conv1d_w, comb_w, comb_b):
    """Pure-JAX reference matching the PyTorch forward."""
    B, C, H, W = x.shape
    k = conv1d_w.shape[-1]
    pad = (k - 1) // 2
    w1d = conv1d_w.reshape(k)

    def conv1d_channels(p):  # p: (B, C)
        pp = jnp.pad(p, ((0, 0), (pad, pad)))
        return sum(w1d[j] * pp[:, j:j + C] for j in range(k))

    max_p = x.max(axis=(2, 3))
    avg_p = x.mean(axis=(2, 3))
    att = conv1d_channels(max_p) + conv1d_channels(avg_p)       # (B, C)
    gate = jax.nn.sigmoid(att)[:, :, None, None]
    xg = x * gate
    out = jnp.einsum('oc,bchw->bohw', comb_w.reshape(-1, C), xg)
    return out + comb_b.reshape(1, -1, 1, 1)


def _make_inputs(key, B, C, H, W):
    Co = C // 2
    k = channel_att_kernel_calc(C)
    kx, kw1, kw2, kb = jax.random.split(key, 4)
    x = jax.random.normal(kx, (B, C, H, W), dtype=jnp.float32)
    conv1d_w = jax.random.normal(kw1, (1, 1, k), dtype=jnp.float32) * 0.3   # Conv1d(1,1,k,bias=False)
    comb_w = jax.random.normal(kw2, (Co, C, 1, 1), dtype=jnp.float32) * 0.1 # Conv2d(C, C/2, 1)
    comb_b = jax.random.normal(kb, (Co,), dtype=jnp.float32) * 0.1
    return x, conv1d_w, comb_w, comb_b


if __name__ == "__main__":
    key = jax.random.PRNGKey(0)
    k_a, k_b = jax.random.split(key)

    # --- test A: fused single-read path (plane fits VMEM) ---
    B, C, H, W = 2, 16, 16, 16
    x, cw, ww, bb = _make_inputs(k_a, B, C, H, W)
    out = jax.block_until_ready(channel_attention_block(x, cw, ww, bb))
    ref = _reference_forward(x, cw, ww, bb)
    assert out.shape == (B, C // 2, H, W)
    assert jnp.allclose(out, ref, atol=1e-5, rtol=1e-5), \
        float(jnp.max(jnp.abs(out - ref)))

    # --- test B: streaming two-pass path (non-8-multiple C, tail-masked HW tiles) ---
    B2, C2, H2, W2 = 2, 12, 20, 20
    x2, cw2, ww2, bb2 = _make_inputs(k_b, B2, C2, H2, W2)
    out2 = jax.block_until_ready(
        channel_attention_block(x2, cw2, ww2, bb2,
                                hw_tile_target=128, force_streaming=True))
    ref2 = _reference_forward(x2, cw2, ww2, bb2)
    assert out2.shape == (B2, C2 // 2, H2, W2)
    assert jnp.allclose(out2, ref2, atol=1e-5, rtol=1e-5), \
        float(jnp.max(jnp.abs(out2 - ref2)))

    print("KERNEL_OK")
</pallas_src>

<mosaic_0001>
module attributes {stable_mosaic.version = 11 : i64} {
  func.func @_fused_kernel(%arg0: i32, %arg1: memref<16x16xf32, #tpu.memory_space<vmem>>, %arg2: memref<8x16xf32, #tpu.memory_space<vmem>>, %arg3: memref<8x1xf32, #tpu.memory_space<vmem>>, %arg4: memref<1x16x256xf32, #tpu.memory_space<vmem>>, %arg5: memref<1x8x256xf32, #tpu.memory_space<vmem>>) attributes {dimension_semantics = [#tpu.dimension_semantics<parallel>], iteration_bounds = array<i64: 2>, scalar_prefetch = 0 : i64, scratch_operands = 0 : i64, tpu.core_type = #tpu.core_type<tc>, window_params = [{pipeline_mode = #tpu.pipeline_mode<synchronous>, transform_indices = @transform_0, window_bounds = array<i64: 16, 16>}, {pipeline_mode = #tpu.pipeline_mode<synchronous>, transform_indices = @transform_1, window_bounds = array<i64: 8, 16>}, {pipeline_mode = #tpu.pipeline_mode<synchronous>, transform_indices = @transform_2, window_bounds = array<i64: 8, 1>}, {transform_indices = @transform_3, window_bounds = array<i64: 1, 16, 256>}, {transform_indices = @transform_4, window_bounds = array<i64: 1, 8, 256>}]} {
    %c0 = arith.constant 0 : index
    %c0_0 = arith.constant 0 : index
    %c0_1 = arith.constant 0 : index
    %0 = vector.load %arg4[%c0, %c0_0, %c0_1] : memref<1x16x256xf32, #tpu.memory_space<vmem>>, vector<1x16x256xf32>
    %1 = vector.shape_cast %0 : vector<1x16x256xf32> to vector<16x256xf32>
    %cst = arith.constant dense<0xFF800000> : vector<16xf32>
    %2 = vector.multi_reduction <maximumf>, %1, %cst [1] : vector<16x256xf32> to vector<16xf32>
    %3 = vector.shape_cast %2 : vector<16xf32> to vector<16x1xf32>
    %cst_2 = arith.constant dense<0.000000e+00> : vector<16xf32>
    %4 = vector.multi_reduction <add>, %1, %cst_2 [1] : vector<16x256xf32> to vector<16xf32>
    %5 = vector.shape_cast %4 : vector<16xf32> to vector<16x1xf32>
    %cst_3 = arith.constant 3.906250e-03 : f32
    %6 = vector.broadcast %cst_3 : f32 to vector<16x1xf32>
    %7 = arith.mulf %5, %6 : vector<16x1xf32>
    %8 = arith.addf %3, %7 : vector<16x1xf32>
    %c0_4 = arith.constant 0 : index
    %c0_5 = arith.constant 0 : index
    %9 = vector.load %arg1[%c0_4, %c0_5] : memref<16x16xf32, #tpu.memory_space<vmem>>, vector<16x16xf32>
    %cst_6 = arith.constant dense<0.000000e+00> : vector<16x1xf32>
    %10 = tpu.matmul %9, %8, %cst_6 {dimension_numbers = #tpu.dot_dimension_numbers<[1], [0], [0], [1], [0, 0, 1, 1], [], []>} : vector<16x16xf32>, vector<16x1xf32>, vector<16x1xf32> -> vector<16x1xf32>
    %11 = arith.negf %10 : vector<16x1xf32>
    %12 = math.exp %11 : vector<16x1xf32>
    %cst_7 = arith.constant 1.000000e+00 : f32
    %13 = vector.broadcast %cst_7 : f32 to vector<16x1xf32>
    %14 = arith.addf %13, %12 : vector<16x1xf32>
    %15 = arith.divf %13, %14 : vector<16x1xf32>
    %16 = vector.broadcast %15 : vector<16x1xf32> to vector<16x256xf32>
    %17 = arith.mulf %1, %16 : vector<16x256xf32>
    %c0_8 = arith.constant 0 : index
    %c0_9 = arith.constant 0 : index
    %18 = vector.load %arg2[%c0_8, %c0_9] : memref<8x16xf32, #tpu.memory_space<vmem>>, vector<8x16xf32>
    %cst_10 = arith.constant dense<0.000000e+00> : vector<8x256xf32>
    %19 = tpu.matmul %18, %17, %cst_10 {dimension_numbers = #tpu.dot_dimension_numbers<[1], [0], [0], [1], [0, 0, 1, 1], [], []>} : vector<8x16xf32>, vector<16x256xf32>, vector<8x256xf32> -> vector<8x256xf32>
    %c0_11 = arith.constant 0 : index
    %c0_12 = arith.constant 0 : index
    %20 = vector.load %arg3[%c0_11, %c0_12] : memref<8x1xf32, #tpu.memory_space<vmem>>, vector<8x1xf32>
    %21 = vector.broadcast %20 : vector<8x1xf32> to vector<8x256xf32>
    %22 = arith.addf %19, %21 : vector<8x256xf32>
    %c0_13 = arith.constant 0 : index
    %c0_14 = arith.constant 0 : index
    %c0_15 = arith.constant 0 : index
    %23 = vector.load %arg5[%c0_13, %c0_14, %c0_15] : memref<1x8x256xf32, #tpu.memory_space<vmem>>, vector<1x8x256xf32>
    %24 = vector.shape_cast %23 : vector<1x8x256xf32> to vector<8x256xf32>
    %25 = vector.shape_cast %22 : vector<8x256xf32> to vector<1x8x256xf32>
    tpu.vector_store %arg5[%c0_13, %c0_14, %c0_15], %25 {strides = array<i32>} : memref<1x8x256xf32, #tpu.memory_space<vmem>>, vector<1x8x256xf32>,
    return
  }
  func.func @transform_0(%arg0: i32) -> (i32, i32) {
    %c0_i32 = arith.constant 0 : i32
    %c0_i32_0 = arith.constant 0 : i32
    %c0_i32_1 = arith.constant 0 : i32
    return %c0_i32, %c0_i32_0 : i32, i32
  }
  func.func @transform_1(%arg0: i32) -> (i32, i32) {
    %c0_i32 = arith.constant 0 : i32
    %c0_i32_0 = arith.constant 0 : i32
    %c0_i32_1 = arith.constant 0 : i32
    return %c0_i32, %c0_i32_0 : i32, i32
  }
  func.func @transform_2(%arg0: i32) -> (i32, i32) {
    %c0_i32 = arith.constant 0 : i32
    %c0_i32_0 = arith.constant 0 : i32
    %c0_i32_1 = arith.constant 0 : i32
    return %c0_i32, %c0_i32_0 : i32, i32
  }
  func.func @transform_3(%arg0: i32) -> (i32, i32, i32) {
    %c0_i32 = arith.constant 0 : i32
    %c0_i32_0 = arith.constant 0 : i32
    %c0_i32_1 = arith.constant 0 : i32
    return %arg0, %c0_i32, %c0_i32_0 : i32, i32, i32
  }
  func.func @transform_4(%arg0: i32) -> (i32, i32, i32) {
    %c0_i32 = arith.constant 0 : i32
    %c0_i32_0 = arith.constant 0 : i32
    %c0_i32_1 = arith.constant 0 : i32
    return %arg0, %c0_i32, %c0_i32_0 : i32, i32, i32
  }
}

</mosaic_0001>

<llo_original>
// kernel: tpu_custom_call.1
$region0: #{tpu_custom_call.1}
  #allocation0 [shape = 'u32[]', space=smem, size = 0x4, offset = 0x4, fixed_abs, tag = 'smem constant byte address 0x4 - core index']
  #allocation1 [shape = 'u32[144,128]{1,0:T(1,128)}', space=vmem, size = 0x12000, scoped, tag = 'internal scratch']
  %s0 = inlined_call_operand.hbm [shape: f32[16,16], index: 0, kind: input, shape index: {}]
  %s1 = inlined_call_operand.vmem [shape: f32[8,16], index: 1, kind: input, shape index: {}]
  %s2 = inlined_call_operand.vmem [shape: f32[8,1], index: 2, kind: input, shape index: {}]
  %s3 = inlined_call_operand.hbm [shape: f32[2,16,256], index: 3, kind: input, shape index: {}]
  %s4 = inlined_call_operand.hbm [shape: f32[2,8,256], index: 4, kind: output, shape index: {}]
  %s5 = sld [smem:[#allocation0]]
  $region57: #{tpu_custom_call.1} parent=0
    _
  %s7 = ssub.s32 1, %s5
  %s8 = scalar_select 0, %s7, %s5
  $region1: #{tpu_custom_call.1} parent=0
    #allocation2 [shape = 'u8[8192]{0}', space=vmem, size = 0x2000, scoped, tag = 'input window, operand 0, single buffered']
    #allocation3 [shape = 's32[2]{0}', space=sflag, size = 0x8, scoped, tag = 'scoped memory for tpu_custom_call.1']
    #allocation4 [shape = 's32[2]{0}', space=sflag, size = 0x8, scoped, tag = 'scoped memory for tpu_custom_call.1']
    #allocation5 [shape = 'u8[32768]{0}', space=vmem, size = 0x8000, scoped, tag = 'input window, operand 3']
    #allocation6 [shape = 's32[2]{0}', space=sflag, size = 0x8, scoped, tag = 'scoped memory for tpu_custom_call.1']
    #allocation7 [shape = 'u8[16384]{0}', space=vmem, size = 0x4000, scoped, tag = 'output window, operand 0']
    %9 = vsyncpa [#allocation3], 0
    %10 = vsyncpa [#allocation6], 0
    %s11 = scalar_lea.sflag [#allocation6], 1
    %12 = vsyncpa %s11, 0
    %13 = vsyncpa [#allocation4], 0
    %s14 = scalar_lea.sflag [#allocation4], 1
    %15 = vsyncpa %s14, 0
    loop: start=0, step=1, limit=4
    $region2: #{tpu_custom_call.1} parent=1 // loop_pre_header
      _
    $region3: #{tpu_custom_call.1} parent=1 // loop_header
      %s17 = sphi 0, %s21
      %p18 = scmp.ge.s32.totalorder %s17, 4
      %s25 = sphi 0, %s25
      %s27 = sphi 0, %s25
      %s28 = sphi 0, %s27
      %s42 = sphi 0, %s28
      %s46 = sphi 0, %s46
      %s48 = sphi 0, %s46
      %s49 = sphi 0, %s48
      %s63 = sphi 0, %s49
      %s67 = sphi 0, %s67
      %s69 = sphi 0, %s67
      %s70 = sphi 0, %s69
      %s84 = sphi 0, %s70
      %s90 = sphi 0, %s92
      %s93 = sphi 0, %s90
      %s94 = sphi 0, %s93
      %s110 = sphi 0, %s94
      %s116 = sphi 0, %s118
      %s119 = sphi 0, %s116
      %s120 = sphi 0, %s119
      %s136 = sphi 0, %s120
    $region4: #{tpu_custom_call.1} parent=1 // loop_header_branch
      %20 = sbr.rel (%p18) target = $region8
    $region5: #{tpu_custom_call.1} parent=1 // loop_body
      %s22 = ssub.s32 %s17, 1
      %s23 = ssub.s32 %s17, 2
      %s24 = sadd.s32 %s17, 1
      %s26 = sadd.s32 %s25, 1
      %p29 = scmp.eq.s32.totalorder %s17, 1
      %p30 = scmp.ne.s32.totalorder %s25, %s27
      %p31 = scmp.eq.s32.totalorder %s17, 0
      %p32 = por %p30, %p31
      %p33 = scmp.ne.s32.totalorder %s25, %s27
      %p34 = scmp.eq.s32.totalorder %s22, 1
      %p35 = por %p33, %p34
      %p36 = scmp.ne.s32.totalorder %s27, %s28
      %p37 = scmp.eq.s32.totalorder %s22, 0
      %p38 = por %p36, %p37
      %p39 = scmp.ne.s32.totalorder %s27, %s28
      %p40 = scmp.eq.s32.totalorder %s23, 1
      %p41 = por %p39, %p40
      %p43 = scmp.ne.s32.totalorder %s28, %s42
      %p44 = scmp.eq.s32.totalorder %s23, 0
      %p45 = por %p43, %p44
      %s47 = sadd.s32 %s46, 1
      %p50 = scmp.eq.s32.totalorder %s17, 1
      %p51 = scmp.ne.s32.totalorder %s46, %s48
      %p52 = scmp.eq.s32.totalorder %s17, 0
      %p53 = por %p51, %p52
      %p54 = scmp.ne.s32.totalorder %s46, %s48
      %p55 = scmp.eq.s32.totalorder %s22, 1
      %p56 = por %p54, %p55
      %p57 = scmp.ne.s32.totalorder %s48, %s49
      %p58 = scmp.eq.s32.totalorder %s22, 0
      %p59 = por %p57, %p58
      %p60 = scmp.ne.s32.totalorder %s48, %s49
      %p61 = scmp.eq.s32.totalorder %s23, 1
      %p62 = por %p60, %p61
      %p64 = scmp.ne.s32.totalorder %s49, %s63
      %p65 = scmp.eq.s32.totalorder %s23, 0
      %p66 = por %p64, %p65
      %s68 = sadd.s32 %s67, 1
      %p71 = scmp.eq.s32.totalorder %s17, 1
      %p72 = scmp.ne.s32.totalorder %s67, %s69
      %p73 = scmp.eq.s32.totalorder %s17, 0
      %p74 = por %p72, %p73
      %p75 = scmp.ne.s32.totalorder %s67, %s69
      %p76 = scmp.eq.s32.totalorder %s22, 1
      %p77 = por %p75, %p76
      %p78 = scmp.ne.s32.totalorder %s69, %s70
      %p79 = scmp.eq.s32.totalorder %s22, 0
      %p80 = por %p78, %p79
      %p81 = scmp.ne.s32.totalorder %s69, %s70
      %p82 = scmp.eq.s32.totalorder %s23, 1
      %p83 = por %p81, %p82
      %p85 = scmp.ne.s32.totalorder %s70, %s84
      %p86 = scmp.eq.s32.totalorder %s23, 0
      %p87 = por %p85, %p86
      %s88 = ssub.s32 %s17, %s24
      %p89 = scmp.eq.s32.totalorder %s88, 0
      %s91 = sadd.s32 %s90, 1
      %s92 = scalar_select %p89, %s90, %s91
      %p95 = pneg %p89
      %p96 = scmp.eq.s32.totalorder %s17, 1
      %p97 = por %p95, %p96
      %p98 = scmp.ne.s32.totalorder %s90, %s93
      %p99 = scmp.eq.s32.totalorder %s17, 0
      %p100 = por %p98, %p99
      %p101 = scmp.ne.s32.totalorder %s90, %s93
      %p102 = scmp.eq.s32.totalorder %s22, 1
      %p103 = por %p101, %p102
      %p104 = scmp.ne.s32.totalorder %s93, %s94
      %p105 = scmp.eq.s32.totalorder %s22, 0
      %p106 = por %p104, %p105
      %p107 = scmp.ne.s32.totalorder %s93, %s94
      %p108 = scmp.eq.s32.totalorder %s23, 1
      %p109 = por %p107, %p108
      %p111 = scmp.ne.s32.totalorder %s94, %s110
      %p112 = scmp.eq.s32.totalorder %s23, 0
      %p113 = por %p111, %p112
      %s114 = ssub.s32 %s17, %s24
      %p115 = scmp.eq.s32.totalorder %s114, 0
      %s117 = sadd.s32 %s116, 1
      %s118 = scalar_select %p115, %s116, %s117
      %p121 = pneg %p115
      %p122 = scmp.eq.s32.totalorder %s17, 1
      %p123 = por %p121, %p122
      %p124 = scmp.ne.s32.totalorder %s116, %s119
      %p125 = scmp.eq.s32.totalorder %s17, 0
      %p126 = por %p124, %p125
      %p127 = scmp.ne.s32.totalorder %s116, %s119
      %p128 = scmp.eq.s32.totalorder %s22, 1
      %p129 = por %p127, %p128
      %p130 = scmp.ne.s32.totalorder %s119, %s120
      %p131 = scmp.eq.s32.totalorder %s22, 0
      %p132 = por %p130, %p131
      %p133 = scmp.ne.s32.totalorder %s119, %s120
      %p134 = scmp.eq.s32.totalorder %s23, 1
      %p135 = por %p133, %p134
      %p137 = scmp.ne.s32.totalorder %s120, %s136
      %p138 = scmp.eq.s32.totalorder %s23, 0
      %p139 = por %p137, %p138
      %p140 = scmp.le.s32.totalorder 1, %s17
      %p141 = scmp.lt.s32.totalorder %s17, 3
      %p142 = pnand %p140, %p141
      %p143 = pneg %p142
      // Predicated region
      $region9: #{tpu_custom_call.1} parent=5 // pred_check
        _
      $region10: #{tpu_custom_call.1} parent=5 // pred_check_branch
        %145 = sbr.rel (%p142) target = $region12
      $region11: #{tpu_custom_call.1} parent=5 // pred_region
        %s146 = ssub.s32 %s17, 1
        // Predicated region
        $region13: #{tpu_custom_call.1} parent=11 // pred_check
          %p147 = pneg %p38
        $region14: #{tpu_custom_call.1} parent=11 // pred_check_branch
          %149 = sbr.rel (%p147) target = $region16
        $region15: #{tpu_custom_call.1} parent=11 // pred_region
          %s151 = ssub.s32 256, 256
          %152 = vsyncadd [#allocation3], %s151
          %s153 = sshll.u32 [#allocation2], 4
          %s154 = int_to_ptr.vmem [resolvable:$true] %s153
          %159 = dma.hbm_to_vmem [thread:$0]  %s0, 256, %s154, [#allocation3], 128, 128, 8
        $region16: #{tpu_custom_call.1} parent=11 // pred_fallthru
          _
        // Predicated region
        $region17: #{tpu_custom_call.1} parent=11 // pred_check
          %p160 = pneg %p59
        $region18: #{tpu_custom_call.1} parent=11 // pred_check_branch
          %162 = sbr.rel (%p160) target = $region20
        $region19: #{tpu_custom_call.1} parent=11 // pred_region
          _
        $region20: #{tpu_custom_call.1} parent=11 // pred_fallthru
          _
        // Predicated region
        $region21: #{tpu_custom_call.1} parent=11 // pred_check
          %p163 = pneg %p80
        $region22: #{tpu_custom_call.1} parent=11 // pred_check_branch
          %165 = sbr.rel (%p163) target = $region24
        $region23: #{tpu_custom_call.1} parent=11 // pred_region
          _
        $region24: #{tpu_custom_call.1} parent=11 // pred_fallthru
          _
      $region12: #{tpu_custom_call.1} parent=5 // pred_fallthru
        _
      %p166 = scmp.lt.s32.totalorder %s17, 2
      // Predicated region
      $region25: #{tpu_custom_call.1} parent=5 // pred_check
        %p167 = pneg %p166
      $region26: #{tpu_custom_call.1} parent=5 // pred_check_branch
        %169 = sbr.rel (%p167) target = $region28
      $region27: #{tpu_custom_call.1} parent=5 // pred_region
        // Predicated region
        $region29: #{tpu_custom_call.1} parent=27 // pred_check
          %p170 = pneg %p100
        $region30: #{tpu_custom_call.1} parent=27 // pred_check_branch
          %172 = sbr.rel (%p170) target = $region32
        $region31: #{tpu_custom_call.1} parent=27 // pred_region
          %s173 = sand.u32 %s90, 1
          %s174 = scalar_lea.sflag [#allocation6], %s173
          %s175 = sand.u32 %s90, 1
          %s176 = smul.addr %s175, 32
          %s177 = scalar_lea.vmem [#allocation5], %s176
          %s179 = ssub.s32 512, 512
          %180 = vsyncadd %s174, %s179
          %s181 = smul.addr %s17, 4
          %s182 = smul.addr %s181, 128
          %s183 = scalar_lea.hbm %s3, %s182
          %s184 = sshll.u32 %s177, 4
          %s185 = int_to_ptr.vmem [resolvable:$true] %s184
          %190 = dma.hbm_to_vmem [thread:$0]  %s183, 512, %s185, %s174, 256, 256, 16
        $region32: #{tpu_custom_call.1} parent=27 // pred_fallthru
          _
      $region28: #{tpu_custom_call.1} parent=5 // pred_fallthru
        _
      %p191 = scmp.le.s32.totalorder 1, %s17
      %p192 = scmp.lt.s32.totalorder %s17, 3
      %p193 = pnand %p191, %p192
      %p194 = pneg %p193
      // Predicated region
      $region33: #{tpu_custom_call.1} parent=5 // pred_check
        _
      $region34: #{tpu_custom_call.1} parent=5 // pred_check_branch
        %196 = sbr.rel (%p193) target = $region36
      $region35: #{tpu_custom_call.1} parent=5 // pred_region
        %s197 = ssub.s32 %s17, 1
        // Predicated region
        $region37: #{tpu_custom_call.1} parent=35 // pred_check
          %p198 = pneg %p38
        $region38: #{tpu_custom_call.1} parent=35 // pred_check_branch
          %200 = sbr.rel (%p198) target = $region40
        $region39: #{tpu_custom_call.1} parent=35 // pred_region
          %201 = dma.done [#allocation3], 256
        $region40: #{tpu_custom_call.1} parent=35 // pred_fallthru
          _
        %s202 = sand.u32 %s93, 1
        %s203 = scalar_lea.sflag [#allocation6], %s202
        %s204 = sand.u32 %s93, 1
        %s205 = smul.addr %s204, 32
        %s206 = scalar_lea.vmem [#allocation5], %s205
        // Predicated region
        $region41: #{tpu_custom_call.1} parent=35 // pred_check
          %p207 = pneg %p106
        $region42: #{tpu_custom_call.1} parent=35 // pred_check_branch
          %209 = sbr.rel (%p207) target = $region44
        $region43: #{tpu_custom_call.1} parent=35 // pred_region
          %210 = dma.done %s203, 512
        $region44: #{tpu_custom_call.1} parent=35 // pred_fallthru
          _
        %p211 = pneg %p38
        %p212 = pneg %p35
        %p213 = pneg %p59
        %p214 = pneg %p56
        %p215 = pneg %p80
        %p216 = pneg %p77
        %s217 = sand.u32 %s93, 1
        %s218 = scalar_lea.sflag [#allocation6], %s217
        %s219 = sand.u32 %s93, 1
        %s220 = smul.addr %s219, 32
        %s221 = scalar_lea.vmem [#allocation5], %s220
        %p222 = pneg %p106
        %p223 = pneg %p103
        %p224 = pneg %p132
        %p225 = pneg %p129
        %s226 = sand.u32 %s119, 1
        %s227 = scalar_lea.sflag [#allocation4], %s226
        %s228 = sand.u32 %s119, 1
        %s229 = smul.addr %s228, 16
        %s230 = scalar_lea.vmem [#allocation7], %s229
        %v231 = vld [vmem:[%s206] sm:$0xff]
        %v232 = vld [vmem:[%s206 + $0x8] sm:$0xff]
        %v233 = vld [vmem:[%s206 + $0x10] sm:$0xff]
        %v234 = vld [vmem:[%s206 + $0x18] sm:$0xff]
        %v235 = vmax.f32 %v231, %v232
        %236 = vmax.xlane.f32.xlu0 %v235
        %v237 = vpop.xlane.xlu0 %236
        %v238 = vmax.f32 %v233, %v234
        %239 = vmax.xlane.f32.xlu0 %v238
        %v240 = vpop.xlane.xlu0 %239
        %v241 = vadd.f32 %v231, %v232
        %242 = vadd.xlane.f32.xlu0 %v241
        %v243 = vpop.xlane.xlu0 %242
        %v244 = vadd.f32 %v233, %v234
        %245 = vadd.xlane.f32.xlu0 %v244
        %v246 = vpop.xlane.xlu0 %245
        %v247 = vmul.f32 %v243, 0.00390625
        %v248 = vmul.f32 %v246, 0.00390625
        %v249 = vadd.f32 %v237, %v247
        %v250 = vadd.f32 %v240, %v248
        %v251 = vld [vmem:[#allocation2] sm:$0xff]
        %v252 = vld [vmem:[#allocation2 + $0x8] sm:$0xff]
        %vm253 = vcmask 130048
        %v255 = vsel %vm253, %v251, 0
        %v258 = vsel %vm253, %v252, 0
        %260 = vmatprep.subr.mxu0 0.0
        %261 = vmatpush1.msra.mxu0 %v249
        %262 = vmatprep.subr.mxu0 0.0
        %263 = vmatpush1.msra.mxu0 %v250
        %264 = vmatprep.subr.mxu0 0.0
        %265 = vmatpush1.msra.mxu0 0.0
        %266 = vmatprep.subr.mxu0 0.0
        %267 = vmatpush1.msra.mxu0 0.0
        %268 = vmatprep.subr.mxu0 0.0
        %269 = vmatpush1.msra.mxu0 0.0
        %270 = vmatprep.subr.mxu0 0.0
        %271 = vmatpush1.msra.mxu0 0.0
        %272 = vmatprep.subr.mxu0 0.0
        %273 = vmatpush1.msra.mxu0 0.0
        %274 = vmatprep.subr.mxu0 0.0
        %275 = vmatpush1.msra.mxu0 0.0
        %276 = vmatprep.subr.mxu0 0.0
        %277 = vmatpush1.msra.mxu0 0.0
        %278 = vmatprep.subr.mxu0 0.0
        %279 = vmatpush1.msra.mxu0 0.0
        %280 = vmatprep.subr.mxu0 0.0
        %281 = vmatpush1.msra.mxu0 0.0
        %282 = vmatprep.subr.mxu0 0.0
        %283 = vmatpush1.msra.mxu0 0.0
        %284 = vmatprep.subr.mxu0 0.0
        %285 = vmatpush1.msra.mxu0 0.0
        %286 = vmatprep.subr.mxu0 0.0
        %287 = vmatpush1.msra.mxu0 0.0
        %288 = vmatprep.subr.mxu0 0.0
        %289 = vmatpush1.msra.mxu0 0.0
        %290 = vmatprep.subr.mxu0 0.0
        %291 = vmatpush1.msra.mxu0 0.0
        %292 = vmatprep.subr.mxu0 0.0
        %293 = vmatpush1.msra.mxu0 0.0
        %294 = vmatprep.subr.mxu0 0.0
        %295 = vmatpush1.msra.mxu0 0.0
        %296 = vmatprep.subr.mxu0 0.0
        %297 = vmatpush1.msra.mxu0 0.0
        %298 = vmatprep.subr.mxu0 0.0
        %299 = vmatpush1.msra.mxu0 0.0
        %300 = vmatprep.subr.mxu0 0.0
        %301 = vmatpush1.msra.mxu0 0.0
        %302 = vmatprep.subr.mxu0 0.0
        %303 = vmatpush1.msra.mxu0 0.0
        %304 = vmatprep.subr.mxu0 0.0
        %305 = vmatpush1.msra.mxu0 0.0
        %306 = vmatprep.subr.mxu0 0.0
        %307 = vmatpush1.msra.mxu0 0.0
        %308 = vmatprep.subr.mxu0 0.0
        %309 = vmatpush1.msra.mxu0 0.0
        %310 = vmatprep.subr.mxu0 0.0
        %311 = vmatpush1.msra.mxu0 0.0
        %312 = vmatprep.subr.mxu0 0.0
        %313 = vmatpush1.msra.mxu0 0.0
        %314 = vmatprep.subr.mxu0 0.0
        %315 = vmatpush1.msra.mxu0 0.0
        %316 = vmatprep.subr.mxu0 0.0
        %317 = vmatpush1.msra.mxu0 0.0
        %318 = vmatprep.subr.mxu0 0.0
        %319 = vmatpush1.msra.mxu0 0.0
        %320 = vmatprep.subr.mxu0 0.0
        %321 = vmatpush1.msra.mxu0 0.0
        %322 = vmatprep.subr.mxu0 0.0
        %323 = vmatpush1.msra.mxu0 0.0
        %324 = vmatprep.mubr.f32.mxu0 0.0
        %325 = vmatmul.mubr.f32.gmra.mrb[0].mxu0 %v255
        %v326 = vpop.f32.mrb[0].mxu0
        %v327 = vadd.f32 0.0, %v326
        %v328 = vpop.f32.mrb[0].mxu0
        %329 = vmatprep.mubr.f32.mxu0 0.0
        %330 = vmatmul.mubr.f32.gmra.mrb[0].mxu0 %v258
        %v331 = vpop.f32.mrb[0].mxu0
        %v332 = vadd.f32 0.0, %v331
        %v333 = vpop.f32.mrb[0].mxu0
        %334 = vdwg.mxu0
        %v335 = vxor.u32 %v327, 2147483648
        %v336 = vxor.u32 %v332, 2147483648
        %v337 = vmul.f32 %v335, 1.442695
        %v338 = vpow.pop %v337
        %v339 = vmul.f32 %v336, 1.442695
        %v340 = vpow.pop %v339
        %v341 = vadd.f32 %v338, 1.0
        %v342 = vadd.f32 %v340, 1.0
        %v343 = vrcp.pop %v341
        %v344 = vmul.f32 1.0, %v343
        %v345 = vrcp.pop %v342
        %v346 = vmul.f32 1.0, %v345
        %348 = vset.pattern.permute.xlu0 0
        %349 = vperm.xlu0 %348, %v344
        %v350 = vpop.permute.xlu0 %349
        %353 = vset.pattern.permute.xlu0 0
        %354 = vperm.xlu0 %353, %v346
        %v355 = vpop.permute.xlu0 %354
        %v357 = vmul.f32 %v231, %v350
        %v358 = vmul.f32 %v232, %v350
        %v359 = vmul.f32 %v233, %v355
        %v360 = vmul.f32 %v234, %v355
        %v361 = vld [vmem:[%s1] sm:$0xff]
        %v362 = vld [vmem:[%s2] sm:$0xff]
        %364 = vset.pattern.permute.xlu0 0
        %365 = vperm.xlu0 %364, %v362
        %v366 = vpop.permute.xlu0 %365
        %v369 = vsel %vm253, %v361, 0
        %371 = vmatprep.subr.mxu0 %v358
        %372 = vmatpush1.msra.mxu0 %v357
        %373 = vmatprep.subr.mxu0 %v360
        %374 = vmatpush1.msra.mxu0 %v359
        %375 = vmatprep.subr.mxu0 0.0
        %376 = vmatpush1.msra.mxu0 0.0
        %377 = vmatprep.subr.mxu0 0.0
        %378 = vmatpush1.msra.mxu0 0.0
        %379 = vmatprep.subr.mxu0 0.0
        %380 = vmatpush1.msra.mxu0 0.0
        %381 = vmatprep.subr.mxu0 0.0
        %382 = vmatpush1.msra.mxu0 0.0
        %383 = vmatprep.subr.mxu0 0.0
        %384 = vmatpush1.msra.mxu0 0.0
        %385 = vmatprep.subr.mxu0 0.0
        %386 = vmatpush1.msra.mxu0 0.0
        %387 = vmatprep.subr.mxu0 0.0
        %388 = vmatpush1.msra.mxu0 0.0
        %389 = vmatprep.subr.mxu0 0.0
        %390 = vmatpush1.msra.mxu0 0.0
        %391 = vmatprep.subr.mxu0 0.0
        %392 = vmatpush1.msra.mxu0 0.0
        %393 = vmatprep.subr.mxu0 0.0
        %394 = vmatpush1.msra.mxu0 0.0
        %395 = vmatprep.subr.mxu0 0.0
        %396 = vmatpush1.msra.mxu0 0.0
        %397 = vmatprep.subr.mxu0 0.0
        %398 = vmatpush1.msra.mxu0 0.0
        %399 = vmatprep.subr.mxu0 0.0
        %400 = vmatpush1.msra.mxu0 0.0
        %401 = vmatprep.subr.mxu0 0.0
        %402 = vmatpush1.msra.mxu0 0.0
        %403 = vmatprep.subr.mxu0 0.0
        %404 = vmatpush1.msra.mxu0 0.0
        %405 = vmatprep.subr.mxu0 0.0
        %406 = vmatpush1.msra.mxu0 0.0
        %407 = vmatprep.subr.mxu0 0.0
        %408 = vmatpush1.msra.mxu0 0.0
        %409 = vmatprep.subr.mxu0 0.0
        %410 = vmatpush1.msra.mxu0 0.0
        %411 = vmatprep.subr.mxu0 0.0
        %412 = vmatpush1.msra.mxu0 0.0
        %413 = vmatprep.subr.mxu0 0.0
        %414 = vmatpush1.msra.mxu0 0.0
        %415 = vmatprep.subr.mxu0 0.0
        %416 = vmatpush1.msra.mxu0 0.0
        %417 = vmatprep.subr.mxu0 0.0
        %418 = vmatpush1.msra.mxu0 0.0
        %419 = vmatprep.subr.mxu0 0.0
        %420 = vmatpush1.msra.mxu0 0.0
        %421 = vmatprep.subr.mxu0 0.0
        %422 = vmatpush1.msra.mxu0 0.0
        %423 = vmatprep.subr.mxu0 0.0
        %424 = vmatpush1.msra.mxu0 0.0
        %425 = vmatprep.subr.mxu0 0.0
        %426 = vmatpush1.msra.mxu0 0.0
        %427 = vmatprep.subr.mxu0 0.0
        %428 = vmatpush1.msra.mxu0 0.0
        %429 = vmatprep.subr.mxu0 0.0
        %430 = vmatpush1.msra.mxu0 0.0
        %431 = vmatprep.subr.mxu0 0.0
        %432 = vmatpush1.msra.mxu0 0.0
        %433 = vmatprep.subr.mxu0 0.0
        %434 = vmatpush1.msra.mxu0 0.0
        %435 = vmatprep.mubr.f32.mxu0 0.0
        %436 = vmatmul.mubr.f32.gmra.mrb[0].mxu0 %v369
        %v437 = vpop.f32.mrb[0].mxu0
        %v438 = vadd.f32 %v366, %v437
        %v439 = vpop.f32.mrb[0].mxu0
        %v440 = vadd.f32 %v366, %v439
        %441 = vdwg.mxu0
        %442 = vst [vmem:[%s230] sm:$0xff] %v438
        %443 = vst [vmem:[%s230 + $0x8] sm:$0xff] %v440
        %s444 = sand.u32 %s119, 1
        %s445 = scalar_lea.sflag [#allocation4], %s444
        %s446 = sand.u32 %s119, 1
        %s447 = smul.addr %s446, 16
        %s448 = scalar_lea.vmem [#allocation7], %s447
        // Predicated region
        $region45: #{tpu_custom_call.1} parent=35 // pred_check
          %p449 = pneg %p129
        $region46: #{tpu_custom_call.1} parent=35 // pred_check_branch
          %451 = sbr.rel (%p449) target = $region48
        $region47: #{tpu_custom_call.1} parent=35 // pred_region
          %s453 = ssub.s32 256, 256
          %454 = vsyncadd %s445, %s453
          %s455 = smul.addr %s22, 2
          %s456 = smul.addr %s455, 128
          %s457 = scalar_lea.hbm %s4, %s456
          %s459 = sshll.u32 %s448, 4
          %s460 = int_to_ptr.vmem [resolvable:$true] %s459
          %462 = dma.vmem_to_hbm [thread:$0]  %s460, 256, %s457, %s445
        $region48: #{tpu_custom_call.1} parent=35 // pred_fallthru
          _
      $region36: #{tpu_custom_call.1} parent=5 // pred_fallthru
        _
      %p463 = scmp.le.s32.totalorder 2, %s17
      // Predicated region
      $region49: #{tpu_custom_call.1} parent=5 // pred_check
        %p464 = pneg %p463
      $region50: #{tpu_custom_call.1} parent=5 // pred_check_branch
        %466 = sbr.rel (%p464) target = $region52
      $region51: #{tpu_custom_call.1} parent=5 // pred_region
        %s467 = ssub.s32 %s17, 2
        // Predicated region
        $region53: #{tpu_custom_call.1} parent=51 // pred_check
          %p468 = pneg %p135
        $region54: #{tpu_custom_call.1} parent=51 // pred_check_branch
          %470 = sbr.rel (%p468) target = $region56
        $region55: #{tpu_custom_call.1} parent=51 // pred_region
          %s471 = sand.u32 %s120, 1
          %s472 = scalar_lea.sflag [#allocation4], %s471
          %s473 = sand.u32 %s120, 1
          %s474 = smul.addr %s473, 16
          %s475 = scalar_lea.vmem [#allocation7], %s474
          %476 = dma.done %s472, 256
        $region56: #{tpu_custom_call.1} parent=51 // pred_fallthru
          _
      $region52: #{tpu_custom_call.1} parent=5 // pred_fallthru
        _
    $region6: #{tpu_custom_call.1} parent=1 // loop_footer
      %s21 = sadd.s32 1, %s17
    $region7: #{tpu_custom_call.1} parent=1 // loop_footer_branch
      %16 = sbr.rel target = $region3
    $region8: #{tpu_custom_call.1} parent=1 // loop_exit
      _
    %477 = vsyncpa [#allocation3], 1
    %s478 = scalar_lea.sflag [#allocation3], 1
    %479 = vsyncpa %s478, 1
    %480 = vsyncpa [#allocation6], 1
    %s481 = scalar_lea.sflag [#allocation6], 1
    %482 = vsyncpa %s481, 1
    %483 = vsyncpa [#allocation4], 1
    %s484 = scalar_lea.sflag [#allocation4], 1
    %485 = vsyncpa %s484, 1

</llo_original>
